<compile_context>
chip_gen: v6e
topology: v6e:2x2x1
jax: 0.10.0
libtpu: 0.0.40
codegen_flags: <defaults>
</compile_context>

<pallas_src>
import jax
import jax.numpy as jnp
from jax.experimental import pallas as pl
from jax.experimental.pallas import tpu as pltpu


def _round_up(n: int, m: int) -> int:
    return ((n + m - 1) // m) * m


def _discriminator_kernel(x_ref, w1_ref, b1_ref, w2_ref, b2_ref, w3_ref, b3_ref,
                          d_ref, c_ref):
    # Cast the activation tile in-kernel (free VALU work hidden under the DMA).
    x_bf = x_ref[...].astype(jnp.bfloat16)

    # Layer 1: f = sigmoid(x @ W1 + b1).  Exact sigmoid — f feeds both heads.
    h1 = jnp.dot(x_bf, w1_ref[...], preferred_element_type=jnp.float32)
    f = 1.0 / (1.0 + jnp.exp(-(h1 + b1_ref[...])))
    f_bf = f.astype(jnp.bfloat16)

    # Discriminator head: d = sigmoid(f @ W2 + b2).  Approx reciprocal (EUP) is
    # fine here — it is the last op on this narrow (tb, 1) column.
    hd = jnp.dot(f_bf, w2_ref[...], preferred_element_type=jnp.float32) + b2_ref[...]
    d_ref[...] = pl.reciprocal(1.0 + jnp.exp(-hd), approx=True).astype(d_ref.dtype)

    # Classifier head: c = f @ W3 + b3 (linear).
    hc = jnp.dot(f_bf, w3_ref[...], preferred_element_type=jnp.float32) + b3_ref[...]
    c_ref[...] = hc.astype(c_ref.dtype)


def pack_discriminator_params(params):
    """One-time parameter preparation (dtype casts) — do NOT call per forward.

    params are PyTorch weights stored transposed ([in, out]):
      w1 [feature_dim, D_Wf_dim], b1 [1, D_Wf_dim]
      w2 [D_Wf_dim, 1],           b2 [1, 1]
      w3 [D_Wf_dim, n_class],     b3 [1, n_class]
    """
    return {
        "w1": params["w1"].astype(jnp.bfloat16),
        "b1": params["b1"].astype(jnp.float32),
        "w2": params["w2"].astype(jnp.bfloat16),
        "b2": params["b2"].astype(jnp.float32),
        "w3": params["w3"].astype(jnp.bfloat16),
        "b3": params["b3"].astype(jnp.float32),
    }


def discriminator_forward(x, packed_params, *, block_b: int = 8192):
    """Fused Pallas forward. x: [B, feature_dim] (f32 or bf16).

    Returns (discriminator_output [B, 1], classification_output [B, n_class]).
    """
    B, feature_dim = x.shape
    d_wf = packed_params["w1"].shape[1]
    n_class = packed_params["w3"].shape[1]

    # ---- batch-tile / VMEM budget selection (per-generation) ---------------
    # v7x has 64 MiB VMEM per TensorCore (vs 128 MiB on v5e/v6e): clamp the
    # tile there and keep the scoped-VMEM limit <= ~48 MiB.
    try:
        vmem_cap = pltpu.get_tpu_info().vmem_capacity_bytes
    except Exception:
        vmem_cap = 64 * 1024 * 1024  # assume the smallest (v7x-class) core
    if vmem_cap < 96 * 1024 * 1024:
        block_b = min(block_b, 4096)
        vmem_limit = 48 * 1024 * 1024
    else:
        vmem_limit = 64 * 1024 * 1024

    if B <= 8:
        tb = B  # full-batch block (last/second-minor dims equal the array dims)
    else:
        tb = min(block_b, _round_up(B, 8))
        # Ensure >= 2 grid steps so both v7x TensorCores share the batch axis.
        if pl.cdiv(B, tb) < 2:
            tb = _round_up(pl.cdiv(B, 2), 8)
    grid = (pl.cdiv(B, tb),)

    def pinned(shape):
        return pl.BlockSpec(shape, lambda i: (0, 0))

    d_out, c_out = pl.pallas_call(
        _discriminator_kernel,
        grid=grid,
        in_specs=[
            pl.BlockSpec((tb, feature_dim), lambda i: (i, 0)),  # x tile (streamed)
            pinned((feature_dim, d_wf)),                        # W1  (resident)
            pinned((1, d_wf)),                                  # b1
            pinned((d_wf, 1)),                                  # W2
            pinned((1, 1)),                                     # b2
            pinned((d_wf, n_class)),                            # W3
            pinned((1, n_class)),                               # b3
        ],
        out_specs=(
            pl.BlockSpec((tb, 1), lambda i: (i, 0)),            # d (narrow, direct)
            pl.BlockSpec((tb, n_class), lambda i: (i, 0)),      # c (narrow, direct)
        ),
        out_shape=(
            jax.ShapeDtypeStruct((B, 1), x.dtype),
            jax.ShapeDtypeStruct((B, n_class), x.dtype),
        ),
        compiler_params=pltpu.CompilerParams(
            dimension_semantics=("parallel",),                  # v7x: 2 TCs split B
            vmem_limit_bytes=vmem_limit,
        ),
    )(x,
      packed_params["w1"], packed_params["b1"],
      packed_params["w2"], packed_params["b2"],
      packed_params["w3"], packed_params["b3"])

    return d_out, c_out


def _reference_forward(x, params):
    f = jax.nn.sigmoid(x @ params["w1"] + params["b1"])
    d = jax.nn.sigmoid(f @ params["w2"] + params["b2"])
    c = f @ params["w3"] + params["b3"]
    return d, c


def _init_params(key, feature_dim, d_wf_dim, n_class):
    """Deterministic synthetic init (PyTorch-Linear-style uniform fan-in)."""
    ks = jax.random.split(key, 6)

    def uni(k, shape, fan_in):
        bound = 1.0 / jnp.sqrt(fan_in)
        return jax.random.uniform(k, shape, jnp.float32, -bound, bound)

    return {
        # stored as [in, out] == PyTorch weight.T
        "w1": uni(ks[0], (feature_dim, d_wf_dim), feature_dim),
        "b1": uni(ks[1], (1, d_wf_dim), feature_dim),
        "w2": uni(ks[2], (d_wf_dim, 1), d_wf_dim),
        "b2": uni(ks[3], (1, 1), d_wf_dim),
        "w3": uni(ks[4], (d_wf_dim, n_class), d_wf_dim),
        "b3": uni(ks[5], (1, n_class), d_wf_dim),
    }


if __name__ == "__main__":
    config = {"feature_dim": 32, "D_Wf_dim": 64, "n_class": 8}
    batch = 8

    key = jax.random.PRNGKey(0)
    k_x, k_p = jax.random.split(key)

    x = jax.random.normal(k_x, (batch, config["feature_dim"]), jnp.float32)
    params = _init_params(k_p, config["feature_dim"],
                          config["D_Wf_dim"], config["n_class"])

    packed = pack_discriminator_params(params)   # one-time weight prep

    d_out, c_out = discriminator_forward(x, packed)
    d_out, c_out = jax.block_until_ready((d_out, c_out))

    d_ref, c_ref = _reference_forward(x, params)
    assert d_out.shape == (batch, 1)
    assert c_out.shape == (batch, config["n_class"])
    # Tolerance covers bf16 MXU operands + approx-reciprocal head sigmoid.
    assert jnp.allclose(d_out, d_ref, atol=2e-2, rtol=2e-2)
    assert jnp.allclose(c_out, c_ref, atol=2e-2, rtol=2e-2)

    print("KERNEL_OK")
</pallas_src>

<mosaic_0001>
module attributes {stable_mosaic.version = 11 : i64} {
  func.func @_discriminator_kernel(%arg0: i32, %arg1: memref<8x32xf32, #tpu.memory_space<vmem>>, %arg2: memref<32x64xbf16, #tpu.memory_space<vmem>>, %arg3: memref<1x64xf32, #tpu.memory_space<vmem>>, %arg4: memref<64x1xbf16, #tpu.memory_space<vmem>>, %arg5: memref<1x1xf32, #tpu.memory_space<vmem>>, %arg6: memref<64x8xbf16, #tpu.memory_space<vmem>>, %arg7: memref<1x8xf32, #tpu.memory_space<vmem>>, %arg8: memref<8x1xf32, #tpu.memory_space<vmem>>, %arg9: memref<8x8xf32, #tpu.memory_space<vmem>>) attributes {dimension_semantics = [#tpu.dimension_semantics<parallel>], iteration_bounds = array<i64: 1>, scalar_prefetch = 0 : i64, scratch_operands = 0 : i64, tpu.core_type = #tpu.core_type<tc>, window_params = [{transform_indices = @transform_0, window_bounds = array<i64: 8, 32>}, {pipeline_mode = #tpu.pipeline_mode<synchronous>, transform_indices = @transform_1, window_bounds = array<i64: 32, 64>}, {pipeline_mode = #tpu.pipeline_mode<synchronous>, transform_indices = @transform_2, window_bounds = array<i64: 1, 64>}, {pipeline_mode = #tpu.pipeline_mode<synchronous>, transform_indices = @transform_3, window_bounds = array<i64: 64, 1>}, {pipeline_mode = #tpu.pipeline_mode<synchronous>, transform_indices = @transform_4, window_bounds = array<i64: 1, 1>}, {pipeline_mode = #tpu.pipeline_mode<synchronous>, transform_indices = @transform_5, window_bounds = array<i64: 64, 8>}, {pipeline_mode = #tpu.pipeline_mode<synchronous>, transform_indices = @transform_6, window_bounds = array<i64: 1, 8>}, {transform_indices = @transform_7, window_bounds = array<i64: 8, 1>}, {transform_indices = @transform_8, window_bounds = array<i64: 8, 8>}]} {
    %c0 = arith.constant 0 : index
    %c0_0 = arith.constant 0 : index
    %0 = vector.load %arg1[%c0, %c0_0] : memref<8x32xf32, #tpu.memory_space<vmem>>, vector<8x32xf32>
    %1 = arith.truncf %0 : vector<8x32xf32> to vector<8x32xbf16>
    %c0_1 = arith.constant 0 : index
    %c0_2 = arith.constant 0 : index
    %2 = vector.load %arg2[%c0_1, %c0_2] : memref<32x64xbf16, #tpu.memory_space<vmem>>, vector<32x64xbf16>
    %cst = arith.constant dense<0.000000e+00> : vector<8x64xf32>
    %3 = tpu.matmul %1, %2, %cst {dimension_numbers = #tpu.dot_dimension_numbers<[1], [0], [0], [1], [0, 0, 1, 1], [], []>} : vector<8x32xbf16>, vector<32x64xbf16>, vector<8x64xf32> -> vector<8x64xf32>
    %c0_3 = arith.constant 0 : index
    %c0_4 = arith.constant 0 : index
    %4 = vector.load %arg3[%c0_3, %c0_4] : memref<1x64xf32, #tpu.memory_space<vmem>>, vector<1x64xf32>
    %5 = vector.broadcast %4 : vector<1x64xf32> to vector<8x64xf32>
    %6 = arith.addf %3, %5 : vector<8x64xf32>
    %cst_5 = arith.constant 0.000000e+00 : f32
    %7 = vector.broadcast %cst_5 : f32 to vector<8x64xf32>
    %8 = arith.subf %7, %6 : vector<8x64xf32>
    %9 = math.exp %8 : vector<8x64xf32>
    %cst_6 = arith.constant 1.000000e+00 : f32
    %10 = vector.broadcast %cst_6 : f32 to vector<8x64xf32>
    %11 = arith.addf %10, %9 : vector<8x64xf32>
    %cst_7 = arith.constant 1.000000e+00 : f32
    %12 = vector.broadcast %cst_7 : f32 to vector<8x64xf32>
    %13 = arith.divf %12, %11 : vector<8x64xf32>
    %14 = arith.truncf %13 : vector<8x64xf32> to vector<8x64xbf16>
    %c0_8 = arith.constant 0 : index
    %c0_9 = arith.constant 0 : index
    %15 = vector.load %arg4[%c0_8, %c0_9] : memref<64x1xbf16, #tpu.memory_space<vmem>>, vector<64x1xbf16>
    %cst_10 = arith.constant dense<0.000000e+00> : vector<8x1xf32>
    %16 = tpu.matmul %14, %15, %cst_10 {dimension_numbers = #tpu.dot_dimension_numbers<[1], [0], [0], [1], [0, 0, 1, 1], [], []>} : vector<8x64xbf16>, vector<64x1xbf16>, vector<8x1xf32> -> vector<8x1xf32>
    %c0_11 = arith.constant 0 : index
    %c0_12 = arith.constant 0 : index
    %17 = vector.load %arg5[%c0_11, %c0_12] : memref<1x1xf32, #tpu.memory_space<vmem>>, vector<1x1xf32>
    %18 = vector.broadcast %17 : vector<1x1xf32> to vector<8x1xf32>
    %19 = arith.addf %16, %18 : vector<8x1xf32>
    %cst_13 = arith.constant 0.000000e+00 : f32
    %20 = vector.broadcast %cst_13 : f32 to vector<8x1xf32>
    %21 = arith.subf %20, %19 : vector<8x1xf32>
    %22 = math.exp %21 : vector<8x1xf32>
    %cst_14 = arith.constant 1.000000e+00 : f32
    %23 = vector.broadcast %cst_14 : f32 to vector<8x1xf32>
    %24 = arith.addf %23, %22 : vector<8x1xf32>
    %25 = tpu.reciprocal %24 {approx = true} : vector<8x1xf32> -> vector<8x1xf32>
    %c0_15 = arith.constant 0 : index
    %c0_16 = arith.constant 0 : index
    %26 = vector.load %arg8[%c0_15, %c0_16] : memref<8x1xf32, #tpu.memory_space<vmem>>, vector<8x1xf32>
    tpu.vector_store %arg8[%c0_15, %c0_16], %25 {strides = array<i32>} : memref<8x1xf32, #tpu.memory_space<vmem>>, vector<8x1xf32>,
    %c0_17 = arith.constant 0 : index
    %c0_18 = arith.constant 0 : index
    %27 = vector.load %arg6[%c0_17, %c0_18] : memref<64x8xbf16, #tpu.memory_space<vmem>>, vector<64x8xbf16>
    %cst_19 = arith.constant dense<0.000000e+00> : vector<8x8xf32>
    %28 = tpu.matmul %14, %27, %cst_19 {dimension_numbers = #tpu.dot_dimension_numbers<[1], [0], [0], [1], [0, 0, 1, 1], [], []>} : vector<8x64xbf16>, vector<64x8xbf16>, vector<8x8xf32> -> vector<8x8xf32>
    %c0_20 = arith.constant 0 : index
    %c0_21 = arith.constant 0 : index
    %29 = vector.load %arg7[%c0_20, %c0_21] : memref<1x8xf32, #tpu.memory_space<vmem>>, vector<1x8xf32>
    %30 = vector.broadcast %29 : vector<1x8xf32> to vector<8x8xf32>
    %31 = arith.addf %28, %30 : vector<8x8xf32>
    %c0_22 = arith.constant 0 : index
    %c0_23 = arith.constant 0 : index
    %32 = vector.load %arg9[%c0_22, %c0_23] : memref<8x8xf32, #tpu.memory_space<vmem>>, vector<8x8xf32>
    tpu.vector_store %arg9[%c0_22, %c0_23], %31 {strides = array<i32>} : memref<8x8xf32, #tpu.memory_space<vmem>>, vector<8x8xf32>,
    return
  }
  func.func @transform_0(%arg0: i32) -> (i32, i32) {
    %c0_i32 = arith.constant 0 : i32
    %c0_i32_0 = arith.constant 0 : i32
    return %arg0, %c0_i32 : i32, i32
  }
  func.func @transform_1(%arg0: i32) -> (i32, i32) {
    %c0_i32 = arith.constant 0 : i32
    %c0_i32_0 = arith.constant 0 : i32
    %c0_i32_1 = arith.constant 0 : i32
    return %c0_i32, %c0_i32_0 : i32, i32
  }
  func.func @transform_2(%arg0: i32) -> (i32, i32) {
    %c0_i32 = arith.constant 0 : i32
    %c0_i32_0 = arith.constant 0 : i32
    %c0_i32_1 = arith.constant 0 : i32
    return %c0_i32, %c0_i32_0 : i32, i32
  }
  func.func @transform_3(%arg0: i32) -> (i32, i32) {
    %c0_i32 = arith.constant 0 : i32
    %c0_i32_0 = arith.constant 0 : i32
    %c0_i32_1 = arith.constant 0 : i32
    return %c0_i32, %c0_i32_0 : i32, i32
  }
  func.func @transform_4(%arg0: i32) -> (i32, i32) {
    %c0_i32 = arith.constant 0 : i32
    %c0_i32_0 = arith.constant 0 : i32
    %c0_i32_1 = arith.constant 0 : i32
    return %c0_i32, %c0_i32_0 : i32, i32
  }
  func.func @transform_5(%arg0: i32) -> (i32, i32) {
    %c0_i32 = arith.constant 0 : i32
    %c0_i32_0 = arith.constant 0 : i32
    %c0_i32_1 = arith.constant 0 : i32
    return %c0_i32, %c0_i32_0 : i32, i32
  }
  func.func @transform_6(%arg0: i32) -> (i32, i32) {
    %c0_i32 = arith.constant 0 : i32
    %c0_i32_0 = arith.constant 0 : i32
    %c0_i32_1 = arith.constant 0 : i32
    return %c0_i32, %c0_i32_0 : i32, i32
  }
  func.func @transform_7(%arg0: i32) -> (i32, i32) {
    %c0_i32 = arith.constant 0 : i32
    %c0_i32_0 = arith.constant 0 : i32
    return %arg0, %c0_i32 : i32, i32
  }
  func.func @transform_8(%arg0: i32) -> (i32, i32) {
    %c0_i32 = arith.constant 0 : i32
    %c0_i32_0 = arith.constant 0 : i32
    return %arg0, %c0_i32 : i32, i32
  }
}

</mosaic_0001>

<llo_original>
// kernel: tpu_custom_call.1
$region0: #{tpu_custom_call.1}
  #allocation0 [shape = 'u32[]', space=smem, size = 0x4, offset = 0x4, fixed_abs, tag = 'smem constant byte address 0x4 - core index']
  #allocation1 [shape = 'u32[144,128]{1,0:T(1,128)}', space=vmem, size = 0x12000, scoped, tag = 'internal scratch']
  #allocation2 [shape = 'f32[1,1]{1,0:T(1,128)S(1)}', space=vmem, size = 0x200, scoped, tag = 'scoped memory for tpu_custom_call.1']
  %s0 = inlined_call_operand.vmem [shape: f32[8,32], index: 0, kind: input, shape index: {}]
  %s1 = inlined_call_operand.vmem [shape: bf16[32,64], index: 1, kind: input, shape index: {}]
  %s2 = inlined_call_operand.vmem [shape: f32[1,64], index: 2, kind: input, shape index: {}]
  %s3 = inlined_call_operand.vmem [shape: bf16[64,1], index: 3, kind: input, shape index: {}]
  %s4 = inlined_call_operand.<no memory space> [shape: f32[1,1], index: 4, kind: input, shape index: {}]
  %s5 = inlined_call_operand.vmem [shape: bf16[64,8], index: 5, kind: input, shape index: {}]
  %s6 = inlined_call_operand.vmem [shape: f32[1,8], index: 6, kind: input, shape index: {}]
  %s7 = inlined_call_operand.vmem [shape: f32[8,1], index: 7, kind: output, shape index: {0}]
  %s8 = inlined_call_operand.hbm [shape: f32[8,8], index: 8, kind: output, shape index: {1}]
  %9 = xla_tuple %s7, %s8
  %s10 = sld [smem:[#allocation0]]
  $region46: #{tpu_custom_call.1} parent=0
    _
  %s12 = ssub.s32 1, %s10
  %s13 = scalar_select 0, %s12, %s10
  %v14 = vstv %s4
  %15 = vst [vmem:[#allocation2] sm:$0x1] %v14
  $region1: #{tpu_custom_call.1} parent=0
    #allocation3 [shape = 'u8[4096]{0}', space=vmem, size = 0x1000, scoped, tag = 'output window, operand 1, single buffered']
    #allocation4 [shape = 's32[1]{0}', space=sflag, size = 0x4, scoped, tag = 'scoped memory for tpu_custom_call.1']
    %16 = vsyncpa [#allocation4], 0
    // Predicated region
    $region2: #{tpu_custom_call.1} parent=1 // pred_check
      _
    $region3: #{tpu_custom_call.1} parent=1 // pred_check_branch
      %18 = sbr.rel (0) target = $region5
    $region4: #{tpu_custom_call.1} parent=1 // pred_region
      _
    $region5: #{tpu_custom_call.1} parent=1 // pred_fallthru
      _
    // Predicated region
    $region6: #{tpu_custom_call.1} parent=1 // pred_check
      _
    $region7: #{tpu_custom_call.1} parent=1 // pred_check_branch
      %20 = sbr.rel (0) target = $region9
    $region8: #{tpu_custom_call.1} parent=1 // pred_region
      _
    $region9: #{tpu_custom_call.1} parent=1 // pred_fallthru
      _
    // Predicated region
    $region10: #{tpu_custom_call.1} parent=1 // pred_check
      _
    $region11: #{tpu_custom_call.1} parent=1 // pred_check_branch
      %22 = sbr.rel (0) target = $region13
    $region12: #{tpu_custom_call.1} parent=1 // pred_region
      _
    $region13: #{tpu_custom_call.1} parent=1 // pred_fallthru
      _
    // Predicated region
    $region14: #{tpu_custom_call.1} parent=1 // pred_check
      _
    $region15: #{tpu_custom_call.1} parent=1 // pred_check_branch
      %24 = sbr.rel (0) target = $region17
    $region16: #{tpu_custom_call.1} parent=1 // pred_region
      _
    $region17: #{tpu_custom_call.1} parent=1 // pred_fallthru
      _
    // Predicated region
    $region18: #{tpu_custom_call.1} parent=1 // pred_check
      _
    $region19: #{tpu_custom_call.1} parent=1 // pred_check_branch
      %26 = sbr.rel (0) target = $region21
    $region20: #{tpu_custom_call.1} parent=1 // pred_region
      _
    $region21: #{tpu_custom_call.1} parent=1 // pred_fallthru
      _
    // Predicated region
    $region22: #{tpu_custom_call.1} parent=1 // pred_check
      _
    $region23: #{tpu_custom_call.1} parent=1 // pred_check_branch
      %28 = sbr.rel (0) target = $region25
    $region24: #{tpu_custom_call.1} parent=1 // pred_region
      _
    $region25: #{tpu_custom_call.1} parent=1 // pred_fallthru
      _
    // Predicated region
    $region26: #{tpu_custom_call.1} parent=1 // pred_check
      _
    $region27: #{tpu_custom_call.1} parent=1 // pred_check_branch
      %30 = sbr.rel (0) target = $region29
    $region28: #{tpu_custom_call.1} parent=1 // pred_region
      _
    $region29: #{tpu_custom_call.1} parent=1 // pred_fallthru
      _
    %v32 = vld [vmem:[%s0] sm:$0xff]
    %v33 = vpack.c.bf16 %v32, %v32
    %v34 = vld [vmem:[%s1] sm:$0xf]
    %v35 = vld [vmem:[%s1 + $0x4] sm:$0xf]
    %v36 = vld [vmem:[%s1 + $0x8] sm:$0xf]
    %v37 = vld [vmem:[%s1 + $0xc] sm:$0xf]
    %v38 = vld [vmem:[%s2] sm:$0x1]
    %v40 = vlaneseq
    %v41 = vshrl.u32 %v40, 7
    %v42 = vsub.s32 0, %v41
    %v43 = vrot.slane %v38, %v42
    %v49 = vunpack.c.l.b16 %v34
    %v50 = vunpack.c.l.b16 %v35
    %v51 = vunpack.c.l.b16 %v36
    %v52 = vunpack.c.l.b16 %v37
    %v53 = vpack.c.b16 %v50, %v49
    %v54 = vpack.c.b16 %v52, %v51
    %vm57 = vcmask 261120
    %v59 = vsel %vm57, %v33, 0
    %61 = vmatprep.subr.bf16.mxu0 0
    %62 = vmatpush1.bf16.msra.mxu0 0
    %63 = vmatprep.subr.bf16.mxu0 0
    %64 = vmatpush1.bf16.msra.mxu0 0
    %65 = vmatprep.subr.bf16.mxu0 0
    %66 = vmatpush1.bf16.msra.mxu0 0
    %67 = vmatprep.subr.bf16.mxu0 0
    %68 = vmatpush1.bf16.msra.mxu0 0
    %69 = vmatprep.subr.bf16.mxu0 0
    %70 = vmatpush1.bf16.msra.mxu0 0
    %71 = vmatprep.subr.bf16.mxu0 0
    %72 = vmatpush1.bf16.msra.mxu0 0
    %73 = vmatprep.subr.bf16.mxu0 0
    %74 = vmatpush1.bf16.msra.mxu0 %v54
    %75 = vmatprep.subr.bf16.mxu0 0
    %76 = vmatpush1.bf16.msra.mxu0 %v53
    %77 = vmatprep.subr.bf16.mxu0 0
    %78 = vmatpush2.bf16.msra.mxu0 0
    %79 = vmatprep.subr.bf16.mxu0 0
    %80 = vmatpush2.bf16.msra.mxu0 0
    %81 = vmatprep.subr.bf16.mxu0 0
    %82 = vmatpush2.bf16.msra.mxu0 0
    %83 = vmatprep.subr.bf16.mxu0 0
    %84 = vmatpush2.bf16.msra.mxu0 0
    %85 = vmatprep.subr.bf16.mxu0 0
    %86 = vmatpush2.bf16.msra.mxu0 0
    %87 = vmatprep.subr.bf16.mxu0 0
    %88 = vmatpush2.bf16.msra.mxu0 0
    %89 = vmatprep.subr.bf16.mxu0 0
    %90 = vmatpush2.bf16.msra.mxu0 0
    %91 = vmatprep.subr.bf16.mxu0 0
    %92 = vmatpush2.bf16.msra.mxu0 0
    %93 = vmatprep.mubr.bf16.mxu0 0
    %94 = vmatmul.mubr.bf16.gmra.mxu0 %v59
    %v95 = vpop.f32.mrf.mxu0
    %v96 = vadd.f32 %v43, %v95
    %v97 = vpop.f32.mrf.mxu0
    %v98 = vpop.f32.mrf.mxu0
    %v99 = vpop.f32.mrf.mxu0
    %100 = vdwg.mxu0
    %v101 = vsub.f32 0.0, %v96
    %v102 = vmul.f32 %v101, 1.442695
    %v103 = vpow.pop %v102
    %v104 = vadd.f32 %v103, 1.0
    %v105 = vrcp.pop %v104
    %v106 = vmul.f32 1.0, %v105
    %v107 = vpack.c.bf16 %v106, %v106
    %v108 = vld [vmem:[%s3] sm:$0xf]
    %v109 = vld [vmem:[%s3 + $0x4] sm:$0xf]
    %v110 = vld [vmem:[%s3 + $0x8] sm:$0xf]
    %v111 = vld [vmem:[%s3 + $0xc] sm:$0xf]
    %v112 = vld [vmem:[%s3 + $0x10] sm:$0xf]
    %v113 = vld [vmem:[%s3 + $0x14] sm:$0xf]
    %v114 = vld [vmem:[%s3 + $0x18] sm:$0xf]
    %v115 = vld [vmem:[%s3 + $0x1c] sm:$0xf]
    %v116 = vld [vmem:[#allocation2] sm:$0x1]
    %v118 = vlaneseq
    %v119 = vshrl.u32 %v118, 7
    %v120 = vsub.s32 0, %v119
    %v121 = vrot.slane %v116, %v120
    %v131 = vunpack.c.l.b16 %v108
    %v132 = vunpack.c.l.b16 %v109
    %v133 = vunpack.c.l.b16 %v110
    %v134 = vunpack.c.l.b16 %v111
    %v135 = vunpack.c.l.b16 %v112
    %v136 = vunpack.c.l.b16 %v113
    %v137 = vunpack.c.l.b16 %v114
    %v138 = vunpack.c.l.b16 %v115
    %v139 = vpack.c.b16 %v132, %v131
    %v140 = vpack.c.b16 %v134, %v133
    %v141 = vpack.c.b16 %v136, %v135
    %v142 = vpack.c.b16 %v138, %v137
    %vm147 = vcmask 523264
    %v149 = vsel %vm147, %v107, 0
    %151 = vmatprep.subr.bf16.mxu0 0
    %152 = vmatpush1.bf16.msra.mxu0 0
    %153 = vmatprep.subr.bf16.mxu0 0
    %154 = vmatpush1.bf16.msra.mxu0 0
    %155 = vmatprep.subr.bf16.mxu0 0
    %156 = vmatpush1.bf16.msra.mxu0 0
    %157 = vmatprep.subr.bf16.mxu0 0
    %158 = vmatpush1.bf16.msra.mxu0 0
    %159 = vmatprep.subr.bf16.mxu0 0
    %160 = vmatpush1.bf16.msra.mxu0 %v142
    %161 = vmatprep.subr.bf16.mxu0 0
    %162 = vmatpush1.bf16.msra.mxu0 %v141
    %163 = vmatprep.subr.bf16.mxu0 0
    %164 = vmatpush1.bf16.msra.mxu0 %v140
    %165 = vmatprep.subr.bf16.mxu0 0
    %166 = vmatpush1.bf16.msra.mxu0 %v139
    %167 = vmatprep.subr.bf16.mxu0 0
    %168 = vmatpush2.bf16.msra.mxu0 0
    %169 = vmatprep.subr.bf16.mxu0 0
    %170 = vmatpush2.bf16.msra.mxu0 0
    %171 = vmatprep.subr.bf16.mxu0 0
    %172 = vmatpush2.bf16.msra.mxu0 0
    %173 = vmatprep.subr.bf16.mxu0 0
    %174 = vmatpush2.bf16.msra.mxu0 0
    %175 = vmatprep.subr.bf16.mxu0 0
    %176 = vmatpush2.bf16.msra.mxu0 0
    %177 = vmatprep.subr.bf16.mxu0 0
    %178 = vmatpush2.bf16.msra.mxu0 0
    %179 = vmatprep.subr.bf16.mxu0 0
    %180 = vmatpush2.bf16.msra.mxu0 0
    %181 = vmatprep.subr.bf16.mxu0 0
    %182 = vmatpush2.bf16.msra.mxu0 0
    %183 = vmatprep.mubr.bf16.mxu0 0
    %184 = vmatmul.mubr.bf16.gmra.mxu0 %v149
    %v185 = vpop.f32.mrf.mxu0
    %v186 = vadd.f32 %v121, %v185
    %v187 = vpop.f32.mrf.mxu0
    %v188 = vpop.f32.mrf.mxu0
    %v189 = vpop.f32.mrf.mxu0
    %190 = vdwg.mxu0
    %v191 = vsub.f32 0.0, %v186
    %v192 = vmul.f32 %v191, 1.442695
    %v193 = vpow.pop %v192
    %v194 = vadd.f32 %v193, 1.0
    %v195 = vrcp.pop %v194
    %vm196 = vcmask 7168
    %197 = vst.msk [vmem:[%s7] sm:$0xff] %vm196, %v195
    %v198 = vld [vmem:[%s5] sm:$0xf]
    %v199 = vld [vmem:[%s5 + $0x4] sm:$0xf]
    %v200 = vld [vmem:[%s5 + $0x8] sm:$0xf]
    %v201 = vld [vmem:[%s5 + $0xc] sm:$0xf]
    %v202 = vld [vmem:[%s5 + $0x10] sm:$0xf]
    %v203 = vld [vmem:[%s5 + $0x14] sm:$0xf]
    %v204 = vld [vmem:[%s5 + $0x18] sm:$0xf]
    %v205 = vld [vmem:[%s5 + $0x1c] sm:$0xf]
    %v206 = vld [vmem:[%s6] sm:$0x1]
    %v208 = vlaneseq
    %v209 = vshrl.u32 %v208, 7
    %v210 = vsub.s32 0, %v209
    %v211 = vrot.slane %v206, %v210
    %v221 = vunpack.c.l.b16 %v198
    %v222 = vunpack.c.l.b16 %v199
    %v223 = vunpack.c.l.b16 %v200
    %v224 = vunpack.c.l.b16 %v201
    %v225 = vunpack.c.l.b16 %v202
    %v226 = vunpack.c.l.b16 %v203
    %v227 = vunpack.c.l.b16 %v204
    %v228 = vunpack.c.l.b16 %v205
    %v229 = vpack.c.b16 %v222, %v221
    %v230 = vpack.c.b16 %v224, %v223
    %v231 = vpack.c.b16 %v226, %v225
    %v232 = vpack.c.b16 %v228, %v227
    %237 = vmatprep.subr.bf16.mxu0 0
    %238 = vmatpush1.bf16.msra.mxu0 0
    %239 = vmatprep.subr.bf16.mxu0 0
    %240 = vmatpush1.bf16.msra.mxu0 0
    %241 = vmatprep.subr.bf16.mxu0 0
    %242 = vmatpush1.bf16.msra.mxu0 0
    %243 = vmatprep.subr.bf16.mxu0 0
    %244 = vmatpush1.bf16.msra.mxu0 0
    %245 = vmatprep.subr.bf16.mxu0 0
    %246 = vmatpush1.bf16.msra.mxu0 %v232
    %247 = vmatprep.subr.bf16.mxu0 0
    %248 = vmatpush1.bf16.msra.mxu0 %v231
    %249 = vmatprep.subr.bf16.mxu0 0
    %250 = vmatpush1.bf16.msra.mxu0 %v230
    %251 = vmatprep.subr.bf16.mxu0 0
    %252 = vmatpush1.bf16.msra.mxu0 %v229
    %253 = vmatprep.subr.bf16.mxu0 0
    %254 = vmatpush2.bf16.msra.mxu0 0
    %255 = vmatprep.subr.bf16.mxu0 0
    %256 = vmatpush2.bf16.msra.mxu0 0
    %257 = vmatprep.subr.bf16.mxu0 0
    %258 = vmatpush2.bf16.msra.mxu0 0
    %259 = vmatprep.subr.bf16.mxu0 0
    %260 = vmatpush2.bf16.msra.mxu0 0
    %261 = vmatprep.subr.bf16.mxu0 0
    %262 = vmatpush2.bf16.msra.mxu0 0
    %263 = vmatprep.subr.bf16.mxu0 0
    %264 = vmatpush2.bf16.msra.mxu0 0
    %265 = vmatprep.subr.bf16.mxu0 0
    %266 = vmatpush2.bf16.msra.mxu0 0
    %267 = vmatprep.subr.bf16.mxu0 0
    %268 = vmatpush2.bf16.msra.mxu0 0
    %269 = vmatprep.mubr.bf16.mxu0 0
    %270 = vmatmul.mubr.bf16.gmra.mxu0 %v149
    %v271 = vpop.f32.mrf.mxu0
    %v272 = vadd.f32 %v211, %v271
    %v273 = vpop.f32.mrf.mxu0
    %v274 = vpop.f32.mrf.mxu0
    %v275 = vpop.f32.mrf.mxu0
    %276 = vdwg.mxu0
    %vm277 = vcmask 64512
    %278 = vst.msk [vmem:[#allocation3] sm:$0xff] %vm277, %v272
    // Predicated region
    $region30: #{tpu_custom_call.1} parent=1 // pred_check
      _
    $region31: #{tpu_custom_call.1} parent=1 // pred_check_branch
      %280 = sbr.rel (0) target = $region33
    $region32: #{tpu_custom_call.1} parent=1 // pred_region
      _
    $region33: #{tpu_custom_call.1} parent=1 // pred_fallthru
      _
    // Predicated region
    $region34: #{tpu_custom_call.1} parent=1 // pred_check
      _
    $region35: #{tpu_custom_call.1} parent=1 // pred_check_branch
      %282 = sbr.rel (0) target = $region37
    $region36: #{tpu_custom_call.1} parent=1 // pred_region
      %s284 = ssub.s32 128, 128
      %285 = vsyncadd [#allocation4], %s284
      %s287 = sshll.u32 [#allocation3], 4
      %s288 = int_to_ptr.vmem [resolvable:$true] %s287
      %290 = dma.vmem_to_hbm [thread:$0]  %s288, 128, %s8, [#allocation4]
    $region37: #{tpu_custom_call.1} parent=1 // pred_fallthru
      _
    // Predicated region
    $region38: #{tpu_custom_call.1} parent=1 // pred_check
      _
    $region39: #{tpu_custom_call.1} parent=1 // pred_check_branch
      %292 = sbr.rel (0) target = $region41
    $region40: #{tpu_custom_call.1} parent=1 // pred_region
      _
    $region41: #{tpu_custom_call.1} parent=1 // pred_fallthru
      _
    // Predicated region
    $region42: #{tpu_custom_call.1} parent=1 // pred_check
      _
    $region43: #{tpu_custom_call.1} parent=1 // pred_check_branch
      %294 = sbr.rel (0) target = $region45
    $region44: #{tpu_custom_call.1} parent=1 // pred_region
      %295 = dma.done [#allocation4], 128
    $region45: #{tpu_custom_call.1} parent=1 // pred_fallthru
      _
    %296 = vsyncpa [#allocation4], 1

</llo_original>
